<compile_context>
chip_gen: v7x
topology: tpu7x:2x2x1
jax: 0.10.0
libtpu: 0.0.40
codegen_flags: <defaults>
</compile_context>

<pallas_src>
import functools

import jax
import jax.numpy as jnp
from jax.experimental import pallas as pl
from jax.experimental.pallas import tpu as pltpu

LANE = 128


def _round_up(x, m):
    return (x + m - 1) // m * m


def _pick_tile(total, desired):
    """Largest multiple of 128 that divides `total` and is <= desired (>= 128)."""
    desired = max(LANE, min(desired, total))
    best = LANE
    t = LANE
    while t <= desired:
        if total % t == 0:
            best = t
        t += LANE
    return best


# ---------------------------------------------------------------------------
# Kernel 1: support = X @ W   (computed exactly once; bf16 result)
# ---------------------------------------------------------------------------
def _support_kernel(x_ref, w_ref, s_ref):
    s_ref[...] = jnp.dot(
        x_ref[...], w_ref[...], preferred_element_type=jnp.float32
    ).astype(s_ref.dtype)


# ---------------------------------------------------------------------------
# Kernel 2: out = A @ support (+ bias)   (K-tiled, f32 accumulator scratch)
# ---------------------------------------------------------------------------
def _make_aggregate_kernel(tile_k, support_resident, has_bias):
    def kernel(*refs):
        if has_bias:
            a_ref, s_ref, b_ref, o_ref, acc_ref = refs
        else:
            a_ref, s_ref, o_ref, acc_ref = refs
            b_ref = None

        k = pl.program_id(1)

        @pl.when(k == 0)
        def _():
            acc_ref[...] = jnp.zeros_like(acc_ref)

        # Cast the adjacency tile to bf16 in-kernel: no wrapper-side HBM pass.
        a_blk = a_ref[...].astype(jnp.bfloat16)

        if support_resident:
            # Full (padded) support lives in VMEM once; slice the K window.
            start = pl.multiple_of(k * tile_k, tile_k)
            s_blk = s_ref[pl.ds(start, tile_k), :]
        else:
            s_blk = s_ref[...]

        acc_ref[...] += jnp.dot(a_blk, s_blk, preferred_element_type=jnp.float32)

        @pl.when(k == pl.num_programs(1) - 1)
        def _():
            result = acc_ref[...]
            if b_ref is not None:
                result = result + b_ref[...]
            o_ref[...] = result.astype(o_ref.dtype)

    return kernel


@functools.partial(
    jax.jit,
    static_argnames=("tile_n", "tile_k", "tile_m", "support_resident_bytes"),
)
def graph_convolution(
    a,
    x,
    weight,
    bias=None,
    *,
    tile_n=1024,
    tile_k=1024,
    tile_m=512,
    support_resident_bytes=8 * 1024 * 1024,
):
    """GCN layer forward: A @ (X @ W) + bias, with dense adjacency A."""
    n, f_in = x.shape
    f_out = weight.shape[1]
    assert a.shape == (n, n)
    out_dtype = x.dtype

    f_in_pad = _round_up(f_in, LANE)
    f_out_pad = _round_up(f_out, LANE)
    n_pad = _round_up(n, LANE)

    # Tiles must divide n_pad (keeps A un-copied whenever n % 128 == 0).
    tile_m = _pick_tile(n_pad, tile_m)
    tile_k = _pick_tile(n_pad, tile_k)
    tile_n = _pick_tile(n_pad, tile_n)
    # Keep >= 2 row tiles when possible so the "parallel" axis can be split
    # across the two TensorCores on v7x.
    if n_pad // tile_n < 2 and n_pad >= 2 * LANE:
        tile_n = _pick_tile(n_pad, n_pad // 2)

    # ---- operand prep -------------------------------------------------------
    # A stays in the caller's dtype (f32, or pre-cast bf16/int8 if the caller
    # provides it); the bf16 cast happens per-tile in the kernel.
    if n_pad != n:
        # TODO(synk): mask the ragged tail in-kernel to avoid this copy of A.
        a_p = jnp.pad(a, ((0, n_pad - n), (0, n_pad - n)))
    else:
        a_p = a

    # X / W are small relative to A; pad to lane-dense shapes and cast to bf16.
    x_p = jnp.pad(x, ((0, n_pad - n), (0, f_in_pad - f_in))).astype(jnp.bfloat16)
    w_p = jnp.pad(
        weight, ((0, f_in_pad - f_in), (0, f_out_pad - f_out))
    ).astype(jnp.bfloat16)

    has_bias = bias is not None
    if has_bias:
        b_p = jnp.pad(bias.astype(jnp.float32), (0, f_out_pad - f_out)).reshape(
            1, f_out_pad
        )

    # ---- Stage 1: support = X @ W (once) ------------------------------------
    support = pl.pallas_call(
        _support_kernel,
        out_shape=jax.ShapeDtypeStruct((n_pad, f_out_pad), jnp.bfloat16),
        grid_spec=pltpu.PrefetchScalarGridSpec(
            num_scalar_prefetch=0,
            grid=(n_pad // tile_m,),
            in_specs=[
                pl.BlockSpec((tile_m, f_in_pad), lambda i: (i, 0)),      # X row tile
                pl.BlockSpec((f_in_pad, f_out_pad), lambda i: (0, 0)),   # W (full)
            ],
            out_specs=pl.BlockSpec((tile_m, f_out_pad), lambda i: (i, 0)),
        ),
        compiler_params=pltpu.CompilerParams(
            dimension_semantics=("parallel",),
        ),
    )(x_p, w_p)

    # ---- Stage 2: out = A @ support (+ bias), K-tiled contraction ------------
    support_bytes = n_pad * f_out_pad * 2  # bf16
    support_resident = support_bytes <= support_resident_bytes

    if support_resident:
        s_spec = pl.BlockSpec((n_pad, f_out_pad), lambda i, k: (0, 0))
        s_vmem = support_bytes
    else:
        s_spec = pl.BlockSpec((tile_k, f_out_pad), lambda i, k: (k, 0))
        s_vmem = 2 * tile_k * f_out_pad * 2

    in_specs = [
        pl.BlockSpec((tile_n, tile_k), lambda i, k: (i, k)),  # A tile (caller dtype)
        s_spec,                                                # support
    ]
    operands = [a_p, support]
    if has_bias:
        in_specs.append(pl.BlockSpec((1, f_out_pad), lambda i, k: (0, 0)))
        operands.append(b_p)

    a_itemsize = jnp.dtype(a_p.dtype).itemsize
    out_itemsize = jnp.dtype(out_dtype).itemsize
    est_vmem = (
        2 * tile_n * tile_k * a_itemsize            # A double-buffer
        + s_vmem                                    # support
        + tile_n * f_out_pad * 4                    # f32 accumulator
        + 2 * tile_n * f_out_pad * out_itemsize     # output double-buffer
        + 2 * f_out_pad * 4                         # bias
    )
    # Explicit limit: >= default scoped VMEM on all gens, <= 48 MiB so it fits
    # comfortably inside v7x's 64 MiB physical VMEM.
    vmem_limit = int(min(max(est_vmem * 3 // 2, 32 * 1024 * 1024), 48 * 1024 * 1024))

    kernel = _make_aggregate_kernel(tile_k, support_resident, has_bias)

    out = pl.pallas_call(
        kernel,
        out_shape=jax.ShapeDtypeStruct((n_pad, f_out_pad), out_dtype),
        grid_spec=pltpu.PrefetchScalarGridSpec(
            num_scalar_prefetch=0,
            grid=(n_pad // tile_n, n_pad // tile_k),
            in_specs=in_specs,
            out_specs=pl.BlockSpec((tile_n, f_out_pad), lambda i, k: (i, 0)),
            scratch_shapes=[pltpu.VMEM((tile_n, f_out_pad), jnp.float32)],
        ),
        compiler_params=pltpu.CompilerParams(
            dimension_semantics=("parallel", "arbitrary"),
            vmem_limit_bytes=vmem_limit,
        ),
    )(*operands)

    return out[:n, :f_out]


def xavier_uniform(key, shape):
    fan_in, fan_out = shape
    bound = (6.0 / (fan_in + fan_out)) ** 0.5
    return jax.random.uniform(key, shape, jnp.float32, -bound, bound)


if __name__ == "__main__":
    # Small, TPU-friendly shapes (N a multiple of 128 -> A is never copied).
    N, F_IN, F_OUT = 256, 48, 16

    key = jax.random.PRNGKey(0)
    k_adj, k_x, k_w, k_b = jax.random.split(key, 4)

    # Deterministic "sparse-like" adjacency: random mask + self loops,
    # row-normalized, stored dense.
    mask = (jax.random.uniform(k_adj, (N, N)) < 0.1).astype(jnp.float32)
    adj = jnp.maximum(mask, mask.T) + jnp.eye(N, dtype=jnp.float32)
    deg = jnp.sum(adj, axis=1, keepdims=True)
    a = adj / deg  # row-normalized dense adjacency (f32)

    x = jax.random.normal(k_x, (N, F_IN), jnp.float32)
    weight = xavier_uniform(k_w, (F_IN, F_OUT))
    bias = jax.random.normal(k_b, (F_OUT,), jnp.float32) * 0.1

    out = graph_convolution(a, x, weight, bias)
    out = jax.block_until_ready(out)
    assert out.shape == (N, F_OUT)

    # Reference 1: bf16-input / f32-accumulate emulation of the kernel math
    # (tight tolerance).
    a_q = a.astype(jnp.bfloat16)
    x_q = x.astype(jnp.bfloat16)
    w_q = weight.astype(jnp.bfloat16)
    support_q = jnp.dot(x_q, w_q, preferred_element_type=jnp.float32).astype(
        jnp.bfloat16
    )
    ref_q = jnp.dot(a_q, support_q, preferred_element_type=jnp.float32) + bias
    assert jnp.allclose(out, ref_q, atol=5e-3, rtol=5e-3), "mismatch vs bf16 reference"

    # Reference 2: full-f32 math (loose tolerance covers the bf16 MXU-input cast).
    ref = a @ (x @ weight) + bias
    assert jnp.allclose(out, ref, atol=1e-1, rtol=1e-1), "mismatch vs f32 reference"

    # No-bias variant (with_bias=False path).
    out_nb = jax.block_until_ready(graph_convolution(a, x, weight, None))
    ref_nb = a @ (x @ weight)
    assert jnp.allclose(out_nb, ref_nb, atol=1e-1, rtol=1e-1), "mismatch (no bias)"

    print("KERNEL_OK")
</pallas_src>

<mosaic_0001>
module attributes {stable_mosaic.version = 11 : i64} {
  func.func @_support_kernel(%arg0: i32, %arg1: memref<256x128xbf16, #tpu.memory_space<vmem>>, %arg2: memref<128x128xbf16, #tpu.memory_space<vmem>>, %arg3: memref<256x128xbf16, #tpu.memory_space<vmem>>) attributes {dimension_semantics = [#tpu.dimension_semantics<parallel>], iteration_bounds = array<i64: 1>, scalar_prefetch = 0 : i64, scratch_operands = 0 : i64, tpu.core_type = #tpu.core_type<tc>, window_params = [{transform_indices = @transform_0, window_bounds = array<i64: 256, 128>}, {pipeline_mode = #tpu.pipeline_mode<synchronous>, transform_indices = @transform_1, window_bounds = array<i64: 128, 128>}, {transform_indices = @transform_2, window_bounds = array<i64: 256, 128>}]} {
    %c0 = arith.constant 0 : index
    %c0_0 = arith.constant 0 : index
    %0 = vector.load %arg1[%c0, %c0_0] : memref<256x128xbf16, #tpu.memory_space<vmem>>, vector<256x128xbf16>
    %c0_1 = arith.constant 0 : index
    %c0_2 = arith.constant 0 : index
    %1 = vector.load %arg2[%c0_1, %c0_2] : memref<128x128xbf16, #tpu.memory_space<vmem>>, vector<128x128xbf16>
    %cst = arith.constant dense<0.000000e+00> : vector<256x128xf32>
    %2 = tpu.matmul %0, %1, %cst {dimension_numbers = #tpu.dot_dimension_numbers<[1], [0], [0], [1], [0, 0, 1, 1], [], []>} : vector<256x128xbf16>, vector<128x128xbf16>, vector<256x128xf32> -> vector<256x128xf32>
    %3 = arith.truncf %2 : vector<256x128xf32> to vector<256x128xbf16>
    %c0_3 = arith.constant 0 : index
    %c0_4 = arith.constant 0 : index
    %4 = vector.load %arg3[%c0_3, %c0_4] : memref<256x128xbf16, #tpu.memory_space<vmem>>, vector<256x128xbf16>
    tpu.vector_store %arg3[%c0_3, %c0_4], %3 {strides = array<i32>} : memref<256x128xbf16, #tpu.memory_space<vmem>>, vector<256x128xbf16>,
    return
  }
  func.func @transform_0(%arg0: i32) -> (i32, i32) {
    %c0_i32 = arith.constant 0 : i32
    %c0_i32_0 = arith.constant 0 : i32
    return %arg0, %c0_i32 : i32, i32
  }
  func.func @transform_1(%arg0: i32) -> (i32, i32) {
    %c0_i32 = arith.constant 0 : i32
    %c0_i32_0 = arith.constant 0 : i32
    %c0_i32_1 = arith.constant 0 : i32
    return %c0_i32, %c0_i32_0 : i32, i32
  }
  func.func @transform_2(%arg0: i32) -> (i32, i32) {
    %c0_i32 = arith.constant 0 : i32
    %c0_i32_0 = arith.constant 0 : i32
    return %arg0, %c0_i32 : i32, i32
  }
}

module attributes {stable_mosaic.version = 11 : i64} {
  func.func @kernel(%arg0: i32, %arg1: i32, %arg2: memref<128x256xf32, #tpu.memory_space<vmem>>, %arg3: memref<256x128xbf16, #tpu.memory_space<vmem>>, %arg4: memref<1x128xf32, #tpu.memory_space<vmem>>, %arg5: memref<128x128xf32, #tpu.memory_space<vmem>>, %arg6: memref<128x128xf32, #tpu.memory_space<vmem>>) attributes {dimension_semantics = [#tpu.dimension_semantics<parallel>, #tpu.dimension_semantics<arbitrary>], iteration_bounds = array<i64: 2, 1>, scalar_prefetch = 0 : i64, scratch_operands = 1 : i64, tpu.core_type = #tpu.core_type<tc>, window_params = [{transform_indices = @transform_0, window_bounds = array<i64: 128, 256>}, {pipeline_mode = #tpu.pipeline_mode<synchronous>, transform_indices = @transform_1, window_bounds = array<i64: 256, 128>}, {pipeline_mode = #tpu.pipeline_mode<synchronous>, transform_indices = @transform_2, window_bounds = array<i64: 1, 128>}, {transform_indices = @transform_3, window_bounds = array<i64: 128, 128>}]} {
    %c0_i32 = arith.constant 0 : i32
    %0 = arith.cmpi eq, %arg1, %c0_i32 : i32
    %1 = arith.extui %0 : i1 to i32
    %c0_i32_0 = arith.constant 0 : i32
    %2 = arith.cmpi ne, %1, %c0_i32_0 : i32
    scf.if %2 {
      %cst_9 = arith.constant 0.000000e+00 : f32
      %16 = vector.broadcast %cst_9 : f32 to vector<128x128xf32>
      %c0_10 = arith.constant 0 : index
      %c0_11 = arith.constant 0 : index
      %17 = vector.load %arg6[%c0_10, %c0_11] : memref<128x128xf32, #tpu.memory_space<vmem>>, vector<128x128xf32>
      tpu.vector_store %arg6[%c0_10, %c0_11], %16 {strides = array<i32>} : memref<128x128xf32, #tpu.memory_space<vmem>>, vector<128x128xf32>,
    } else {
    }
    %c0 = arith.constant 0 : index
    %c0_1 = arith.constant 0 : index
    %3 = vector.load %arg2[%c0, %c0_1] : memref<128x256xf32, #tpu.memory_space<vmem>>, vector<128x256xf32>
    %4 = arith.truncf %3 : vector<128x256xf32> to vector<128x256xbf16>
    %c256_i32 = arith.constant 256 : i32
    %5 = arith.muli %arg1, %c256_i32 : i32
    %6 = tpu.assume_multiple %5, 256 : i32
    %7 = arith.index_cast %6 : i32 to index
    %c0_2 = arith.constant 0 : index
    %8 = vector.load %arg3[%7, %c0_2] : memref<256x128xbf16, #tpu.memory_space<vmem>>, vector<256x128xbf16>
    %c0_3 = arith.constant 0 : index
    %c0_4 = arith.constant 0 : index
    %9 = vector.load %arg6[%c0_3, %c0_4] : memref<128x128xf32, #tpu.memory_space<vmem>>, vector<128x128xf32>
    %cst = arith.constant dense<0.000000e+00> : vector<128x128xf32>
    %10 = tpu.matmul %4, %8, %cst {dimension_numbers = #tpu.dot_dimension_numbers<[1], [0], [0], [1], [0, 0, 1, 1], [], []>} : vector<128x256xbf16>, vector<256x128xbf16>, vector<128x128xf32> -> vector<128x128xf32>
    %11 = arith.addf %9, %10 : vector<128x128xf32>
    %c0_5 = arith.constant 0 : index
    %c0_6 = arith.constant 0 : index
    %12 = vector.load %arg6[%c0_5, %c0_6] : memref<128x128xf32, #tpu.memory_space<vmem>>, vector<128x128xf32>
    tpu.vector_store %arg6[%c0_5, %c0_6], %11 {strides = array<i32>} : memref<128x128xf32, #tpu.memory_space<vmem>>, vector<128x128xf32>,
    %c0_i32_7 = arith.constant 0 : i32
    %13 = arith.cmpi eq, %arg1, %c0_i32_7 : i32
    %14 = arith.extui %13 : i1 to i32
    %c0_i32_8 = arith.constant 0 : i32
    %15 = arith.cmpi ne, %14, %c0_i32_8 : i32
    scf.if %15 {
      %c0_9 = arith.constant 0 : index
      %c0_10 = arith.constant 0 : index
      %16 = vector.load %arg6[%c0_9, %c0_10] : memref<128x128xf32, #tpu.memory_space<vmem>>, vector<128x128xf32>
      %c0_11 = arith.constant 0 : index
      %c0_12 = arith.constant 0 : index
      %17 = vector.load %arg4[%c0_11, %c0_12] : memref<1x128xf32, #tpu.memory_space<vmem>>, vector<1x128xf32>
      %18 = vector.broadcast %17 : vector<1x128xf32> to vector<128x128xf32>
      %19 = arith.addf %16, %18 : vector<128x128xf32>
      %c0_13 = arith.constant 0 : index
      %c0_14 = arith.constant 0 : index
      %20 = vector.load %arg5[%c0_13, %c0_14] : memref<128x128xf32, #tpu.memory_space<vmem>>, vector<128x128xf32>
      tpu.vector_store %arg5[%c0_13, %c0_14], %19 {strides = array<i32>} : memref<128x128xf32, #tpu.memory_space<vmem>>, vector<128x128xf32>,
    } else {
    }
    return
  }
  func.func @transform_0(%arg0: i32, %arg1: i32) -> (i32, i32) {
    %c0_i32 = arith.constant 0 : i32
    return %arg0, %arg1 : i32, i32
  }
  func.func @transform_1(%arg0: i32, %arg1: i32) -> (i32, i32) {
    %c0_i32 = arith.constant 0 : i32
    %c0_i32_0 = arith.constant 0 : i32
    %c0_i32_1 = arith.constant 0 : i32
    return %c0_i32, %c0_i32_0 : i32, i32
  }
  func.func @transform_2(%arg0: i32, %arg1: i32) -> (i32, i32) {
    %c0_i32 = arith.constant 0 : i32
    %c0_i32_0 = arith.constant 0 : i32
    %c0_i32_1 = arith.constant 0 : i32
    return %c0_i32, %c0_i32_0 : i32, i32
  }
  func.func @transform_3(%arg0: i32, %arg1: i32) -> (i32, i32) {
    %c0_i32 = arith.constant 0 : i32
    %c0_i32_0 = arith.constant 0 : i32
    return %arg0, %c0_i32 : i32, i32
  }
}

</mosaic_0001>

<llo_original>
// kernel: graph_convolution.2
$region0: #{graph_convolution.2}
  #allocation0 [shape = 'u32[]', space=smem, size = 0x4, offset = 0x4, fixed_abs, tag = 'smem constant byte address 0x4 - core index']
  #allocation1 [shape = 'u32[144,128]{1,0:T(1,128)}', space=vmem, size = 0x12000, scoped, tag = 'internal scratch']
  %s0 = inlined_call_operand.vmem [shape: bf16[256,128], index: 0, kind: input, shape index: {}]
  %s1 = inlined_call_operand.vmem [shape: bf16[128,128], index: 1, kind: input, shape index: {}]
  %s2 = inlined_call_operand.vmem [shape: bf16[256,128], index: 2, kind: output, shape index: {}]
  %s3 = sld [smem:[#allocation0]]
  $region18: #{graph_convolution.2} parent=0
    _
  %s5 = ssub.s32 1, %s3
  %s6 = scalar_select 0, %s5, %s3
  // Predicated region
  $region2: #{graph_convolution.2} parent=0 // pred_check
    _
  $region3: #{graph_convolution.2} parent=0 // pred_check_branch
    %8 = sbr.rel (0) target = $region5
  $region4: #{graph_convolution.2} parent=0 // pred_region
    _
  $region5: #{graph_convolution.2} parent=0 // pred_fallthru
    _
  // Predicated region
  $region6: #{graph_convolution.2} parent=0 // pred_check
    _
  $region7: #{graph_convolution.2} parent=0 // pred_check_branch
    %10 = sbr.rel (0) target = $region9
  $region8: #{graph_convolution.2} parent=0 // pred_region
    _
  $region9: #{graph_convolution.2} parent=0 // pred_fallthru
    _
  %v12 = vld [vmem:[%s0] sm:$0xf]
  %v13 = vld [vmem:[%s0 + $0x4] sm:$0xf]
  %v14 = vld [vmem:[%s0 + $0x8] sm:$0xf]
  %v15 = vld [vmem:[%s0 + $0xc] sm:$0xf]
  %v16 = vld [vmem:[%s0 + $0x10] sm:$0xf]
  %v17 = vld [vmem:[%s0 + $0x14] sm:$0xf]
  %v18 = vld [vmem:[%s0 + $0x18] sm:$0xf]
  %v19 = vld [vmem:[%s0 + $0x1c] sm:$0xf]
  %v20 = vld [vmem:[%s0 + $0x20] sm:$0xf]
  %v21 = vld [vmem:[%s0 + $0x24] sm:$0xf]
  %v22 = vld [vmem:[%s0 + $0x28] sm:$0xf]
  %v23 = vld [vmem:[%s0 + $0x2c] sm:$0xf]
  %v24 = vld [vmem:[%s0 + $0x30] sm:$0xf]
  %v25 = vld [vmem:[%s0 + $0x34] sm:$0xf]
  %v26 = vld [vmem:[%s0 + $0x38] sm:$0xf]
  %v27 = vld [vmem:[%s0 + $0x3c] sm:$0xf]
  %v28 = vld [vmem:[%s0 + $0x40] sm:$0xf]
  %v29 = vld [vmem:[%s0 + $0x44] sm:$0xf]
  %v30 = vld [vmem:[%s0 + $0x48] sm:$0xf]
  %v31 = vld [vmem:[%s0 + $0x4c] sm:$0xf]
  %v32 = vld [vmem:[%s0 + $0x50] sm:$0xf]
  %v33 = vld [vmem:[%s0 + $0x54] sm:$0xf]
  %v34 = vld [vmem:[%s0 + $0x58] sm:$0xf]
  %v35 = vld [vmem:[%s0 + $0x5c] sm:$0xf]
  %v36 = vld [vmem:[%s0 + $0x60] sm:$0xf]
  %v37 = vld [vmem:[%s0 + $0x64] sm:$0xf]
  %v38 = vld [vmem:[%s0 + $0x68] sm:$0xf]
  %v39 = vld [vmem:[%s0 + $0x6c] sm:$0xf]
  %v40 = vld [vmem:[%s0 + $0x70] sm:$0xf]
  %v41 = vld [vmem:[%s0 + $0x74] sm:$0xf]
  %v42 = vld [vmem:[%s0 + $0x78] sm:$0xf]
  %v43 = vld [vmem:[%s0 + $0x7c] sm:$0xf]
  %v44 = vld [vmem:[%s1] sm:$0xf]
  %v45 = vld [vmem:[%s1 + $0x4] sm:$0xf]
  %v46 = vld [vmem:[%s1 + $0x8] sm:$0xf]
  %v47 = vld [vmem:[%s1 + $0xc] sm:$0xf]
  %v48 = vld [vmem:[%s1 + $0x10] sm:$0xf]
  %v49 = vld [vmem:[%s1 + $0x14] sm:$0xf]
  %v50 = vld [vmem:[%s1 + $0x18] sm:$0xf]
  %v51 = vld [vmem:[%s1 + $0x1c] sm:$0xf]
  %v52 = vld [vmem:[%s1 + $0x20] sm:$0xf]
  %v53 = vld [vmem:[%s1 + $0x24] sm:$0xf]
  %v54 = vld [vmem:[%s1 + $0x28] sm:$0xf]
  %v55 = vld [vmem:[%s1 + $0x2c] sm:$0xf]
  %v56 = vld [vmem:[%s1 + $0x30] sm:$0xf]
  %v57 = vld [vmem:[%s1 + $0x34] sm:$0xf]
  %v58 = vld [vmem:[%s1 + $0x38] sm:$0xf]
  %v59 = vld [vmem:[%s1 + $0x3c] sm:$0xf]
  %v92 = vunpack.c.l.b16 %v12
  %v93 = vunpack.c.l.b16 %v13
  %v94 = vunpack.c.l.b16 %v14
  %v95 = vunpack.c.l.b16 %v15
  %v96 = vunpack.c.l.b16 %v16
  %v97 = vunpack.c.l.b16 %v17
  %v98 = vunpack.c.l.b16 %v18
  %v99 = vunpack.c.l.b16 %v19
  %v100 = vunpack.c.l.b16 %v20
  %v101 = vunpack.c.l.b16 %v21
  %v102 = vunpack.c.l.b16 %v22
  %v103 = vunpack.c.l.b16 %v23
  %v104 = vunpack.c.l.b16 %v24
  %v105 = vunpack.c.l.b16 %v25
  %v106 = vunpack.c.l.b16 %v26
  %v107 = vunpack.c.l.b16 %v27
  %v108 = vunpack.c.l.b16 %v28
  %v109 = vunpack.c.l.b16 %v29
  %v110 = vunpack.c.l.b16 %v30
  %v111 = vunpack.c.l.b16 %v31
  %v112 = vunpack.c.l.b16 %v32
  %v113 = vunpack.c.l.b16 %v33
  %v114 = vunpack.c.l.b16 %v34
  %v115 = vunpack.c.l.b16 %v35
  %v116 = vunpack.c.l.b16 %v36
  %v117 = vunpack.c.l.b16 %v37
  %v118 = vunpack.c.l.b16 %v38
  %v119 = vunpack.c.l.b16 %v39
  %v120 = vunpack.c.l.b16 %v40
  %v121 = vunpack.c.l.b16 %v41
  %v122 = vunpack.c.l.b16 %v42
  %v123 = vunpack.c.l.b16 %v43
  %v124 = vpack.c.b16 %v93, %v92
  %v125 = vpack.c.b16 %v95, %v94
  %v126 = vpack.c.b16 %v97, %v96
  %v127 = vpack.c.b16 %v99, %v98
  %v128 = vpack.c.b16 %v101, %v100
  %v129 = vpack.c.b16 %v103, %v102
  %v130 = vpack.c.b16 %v105, %v104
  %v131 = vpack.c.b16 %v107, %v106
  %v132 = vpack.c.b16 %v109, %v108
  %v133 = vpack.c.b16 %v111, %v110
  %v134 = vpack.c.b16 %v113, %v112
  %v135 = vpack.c.b16 %v115, %v114
  %v136 = vpack.c.b16 %v117, %v116
  %v137 = vpack.c.b16 %v119, %v118
  %v138 = vpack.c.b16 %v121, %v120
  %v139 = vpack.c.b16 %v123, %v122
  %v172 = vunpack.c.l.b16 %v44
  %v173 = vunpack.c.l.b16 %v45
  %v174 = vunpack.c.l.b16 %v46
  %v175 = vunpack.c.l.b16 %v47
  %v176 = vunpack.c.l.b16 %v48
  %v177 = vunpack.c.l.b16 %v49
  %v178 = vunpack.c.l.b16 %v50
  %v179 = vunpack.c.l.b16 %v51
  %v180 = vunpack.c.l.b16 %v52
  %v181 = vunpack.c.l.b16 %v53
  %v182 = vunpack.c.l.b16 %v54
  %v183 = vunpack.c.l.b16 %v55
  %v184 = vunpack.c.l.b16 %v56
  %v185 = vunpack.c.l.b16 %v57
  %v186 = vunpack.c.l.b16 %v58
  %v187 = vunpack.c.l.b16 %v59
  %v188 = vpack.c.b16 %v173, %v172
  %v189 = vpack.c.b16 %v175, %v174
  %v190 = vpack.c.b16 %v177, %v176
  %v191 = vpack.c.b16 %v179, %v178
  %v192 = vpack.c.b16 %v181, %v180
  %v193 = vpack.c.b16 %v183, %v182
  %v194 = vpack.c.b16 %v185, %v184
  %v195 = vpack.c.b16 %v187, %v186
  %204 = vmatprep.subr.bf16.mxu0 0
  %205 = vmatpush1.bf16.msra.mxu0 %v188
  %206 = vmatprep.subr.bf16.mxu0 0
  %207 = vmatpush1.bf16.msra.mxu0 %v189
  %208 = vmatprep.subr.bf16.mxu0 0
  %209 = vmatpush1.bf16.msra.mxu0 %v190
  %210 = vmatprep.subr.bf16.mxu0 0
  %211 = vmatpush1.bf16.msra.mxu0 %v191
  %212 = vmatprep.subr.bf16.mxu0 0
  %213 = vmatpush1.bf16.msra.mxu0 %v192
  %214 = vmatprep.subr.bf16.mxu0 0
  %215 = vmatpush1.bf16.msra.mxu0 %v193
  %216 = vmatprep.subr.bf16.mxu0 0
  %217 = vmatpush1.bf16.msra.mxu0 %v194
  %218 = vmatprep.subr.bf16.mxu0 0
  %219 = vmatpush1.bf16.msra.mxu0 %v195
  %220 = vmatprep.subr.bf16.mxu0 0
  %221 = vmatpush1.bf16.msra.mxu0 0
  %222 = vmatprep.subr.bf16.mxu0 0
  %223 = vmatpush1.bf16.msra.mxu0 0
  %224 = vmatprep.subr.bf16.mxu0 0
  %225 = vmatpush1.bf16.msra.mxu0 0
  %226 = vmatprep.subr.bf16.mxu0 0
  %227 = vmatpush1.bf16.msra.mxu0 0
  %228 = vmatprep.subr.bf16.mxu0 0
  %229 = vmatpush1.bf16.msra.mxu0 0
  %230 = vmatprep.subr.bf16.mxu0 0
  %231 = vmatpush1.bf16.msra.mxu0 0
  %232 = vmatprep.subr.bf16.mxu0 0
  %233 = vmatpush1.bf16.msra.mxu0 0
  %234 = vmatprep.subr.bf16.mxu0 0
  %235 = vmatpush1.bf16.msra.mxu0 0
  %236 = vmatprep.mubr.bf16.mxu0 0
  %237 = vmatmul.mubr.bf16.gmra.mrb[0].mxu0 %v124
  %v238 = vpop.f32.mrb[0].mxu0
  %v239 = vadd.f32 0.0, %v238
  %v240 = vpop.f32.mrb[0].mxu0
  %v241 = vpop.f32.mrb[0].mxu0
  %v242 = vadd.f32 0.0, %v241
  %v243 = vpop.f32.mrb[0].mxu0
  %244 = vmatprep.mubr.bf16.mxu0 0
  %245 = vmatmul.mubr.bf16.gmra.mrb[0].mxu0 %v125
  %v246 = vpop.f32.mrb[0].mxu0
  %v247 = vadd.f32 0.0, %v246
  %v248 = vpop.f32.mrb[0].mxu0
  %v249 = vpop.f32.mrb[0].mxu0
  %v250 = vadd.f32 0.0, %v249
  %v251 = vpop.f32.mrb[0].mxu0
  %252 = vmatprep.mubr.bf16.mxu0 0
  %253 = vmatmul.mubr.bf16.gmra.mrb[0].mxu0 %v126
  %v254 = vpop.f32.mrb[0].mxu0
  %v255 = vadd.f32 0.0, %v254
  %v256 = vpop.f32.mrb[0].mxu0
  %v257 = vpop.f32.mrb[0].mxu0
  %v258 = vadd.f32 0.0, %v257
  %v259 = vpop.f32.mrb[0].mxu0
  %260 = vmatprep.mubr.bf16.mxu0 0
  %261 = vmatmul.mubr.bf16.gmra.mrb[0].mxu0 %v127
  %v262 = vpop.f32.mrb[0].mxu0
  %v263 = vadd.f32 0.0, %v262
  %v264 = vpop.f32.mrb[0].mxu0
  %v265 = vpop.f32.mrb[0].mxu0
  %v266 = vadd.f32 0.0, %v265
  %v267 = vpop.f32.mrb[0].mxu0
  %268 = vmatprep.mubr.bf16.mxu0 0
  %269 = vmatmul.mubr.bf16.gmra.mrb[0].mxu0 %v128
  %v270 = vpop.f32.mrb[0].mxu0
  %v271 = vadd.f32 0.0, %v270
  %v272 = vpop.f32.mrb[0].mxu0
  %v273 = vpop.f32.mrb[0].mxu0
  %v274 = vadd.f32 0.0, %v273
  %v275 = vpop.f32.mrb[0].mxu0
  %276 = vmatprep.mubr.bf16.mxu0 0
  %277 = vmatmul.mubr.bf16.gmra.mrb[0].mxu0 %v129
  %v278 = vpop.f32.mrb[0].mxu0
  %v279 = vadd.f32 0.0, %v278
  %v280 = vpop.f32.mrb[0].mxu0
  %v281 = vpop.f32.mrb[0].mxu0
  %v282 = vadd.f32 0.0, %v281
  %v283 = vpop.f32.mrb[0].mxu0
  %284 = vmatprep.mubr.bf16.mxu0 0
  %285 = vmatmul.mubr.bf16.gmra.mrb[0].mxu0 %v130
  %v286 = vpop.f32.mrb[0].mxu0
  %v287 = vadd.f32 0.0, %v286
  %v288 = vpop.f32.mrb[0].mxu0
  %v289 = vpop.f32.mrb[0].mxu0
  %v290 = vadd.f32 0.0, %v289
  %v291 = vpop.f32.mrb[0].mxu0
  %292 = vmatprep.mubr.bf16.mxu0 0
  %293 = vmatmul.mubr.bf16.gmra.mrb[0].mxu0 %v131
  %v294 = vpop.f32.mrb[0].mxu0
  %v295 = vadd.f32 0.0, %v294
  %v296 = vpop.f32.mrb[0].mxu0
  %v297 = vpop.f32.mrb[0].mxu0
  %v298 = vadd.f32 0.0, %v297
  %v299 = vpop.f32.mrb[0].mxu0
  %300 = vmatprep.mubr.bf16.mxu0 0
  %301 = vmatmul.mubr.bf16.gmra.mrb[0].mxu0 %v132
  %v302 = vpop.f32.mrb[0].mxu0
  %v303 = vadd.f32 0.0, %v302
  %v304 = vpop.f32.mrb[0].mxu0
  %v305 = vpop.f32.mrb[0].mxu0
  %v306 = vadd.f32 0.0, %v305
  %v307 = vpop.f32.mrb[0].mxu0
  %308 = vmatprep.mubr.bf16.mxu0 0
  %309 = vmatmul.mubr.bf16.gmra.mrb[0].mxu0 %v133
  %v310 = vpop.f32.mrb[0].mxu0
  %v311 = vadd.f32 0.0, %v310
  %v312 = vpop.f32.mrb[0].mxu0
  %v313 = vpop.f32.mrb[0].mxu0
  %v314 = vadd.f32 0.0, %v313
  %v315 = vpop.f32.mrb[0].mxu0
  %316 = vmatprep.mubr.bf16.mxu0 0
  %317 = vmatmul.mubr.bf16.gmra.mrb[0].mxu0 %v134
  %v318 = vpop.f32.mrb[0].mxu0
  %v319 = vadd.f32 0.0, %v318
  %v320 = vpop.f32.mrb[0].mxu0
  %v321 = vpop.f32.mrb[0].mxu0
  %v322 = vadd.f32 0.0, %v321
  %v323 = vpop.f32.mrb[0].mxu0
  %324 = vmatprep.mubr.bf16.mxu0 0
  %325 = vmatmul.mubr.bf16.gmra.mrb[0].mxu0 %v135
  %v326 = vpop.f32.mrb[0].mxu0
  %v327 = vadd.f32 0.0, %v326
  %v328 = vpop.f32.mrb[0].mxu0
  %v329 = vpop.f32.mrb[0].mxu0
  %v330 = vadd.f32 0.0, %v329
  %v331 = vpop.f32.mrb[0].mxu0
  %332 = vmatprep.mubr.bf16.mxu0 0
  %333 = vmatmul.mubr.bf16.gmra.mrb[0].mxu0 %v136
  %v334 = vpop.f32.mrb[0].mxu0
  %v335 = vadd.f32 0.0, %v334
  %v336 = vpop.f32.mrb[0].mxu0
  %v337 = vpop.f32.mrb[0].mxu0
  %v338 = vadd.f32 0.0, %v337
  %v339 = vpop.f32.mrb[0].mxu0
  %340 = vmatprep.mubr.bf16.mxu0 0
  %341 = vmatmul.mubr.bf16.gmra.mrb[0].mxu0 %v137
  %v342 = vpop.f32.mrb[0].mxu0
  %v343 = vadd.f32 0.0, %v342
  %v344 = vpop.f32.mrb[0].mxu0
  %v345 = vpop.f32.mrb[0].mxu0
  %v346 = vadd.f32 0.0, %v345
  %v347 = vpop.f32.mrb[0].mxu0
  %348 = vmatprep.mubr.bf16.mxu0 0
  %349 = vmatmul.mubr.bf16.gmra.mrb[0].mxu0 %v138
  %v350 = vpop.f32.mrb[0].mxu0
  %v351 = vadd.f32 0.0, %v350
  %v352 = vpop.f32.mrb[0].mxu0
  %v353 = vpop.f32.mrb[0].mxu0
  %v354 = vadd.f32 0.0, %v353
  %v355 = vpop.f32.mrb[0].mxu0
  %356 = vmatprep.mubr.bf16.mxu0 0
  %357 = vmatmul.mubr.bf16.gmra.mrb[0].mxu0 %v139
  %v358 = vpop.f32.mrb[0].mxu0
  %v359 = vadd.f32 0.0, %v358
  %v360 = vpop.f32.mrb[0].mxu0
  %v361 = vpop.f32.mrb[0].mxu0
  %v362 = vadd.f32 0.0, %v361
  %v363 = vpop.f32.mrb[0].mxu0
  %364 = vdwg.mxu0
  %v365 = vpack.c.bf16 %v242, %v239
  %v366 = vpack.c.bf16 %v250, %v247
  %v367 = vpack.c.bf16 %v258, %v255
  %v368 = vpack.c.bf16 %v266, %v263
  %v369 = vpack.c.bf16 %v274, %v271
  %v370 = vpack.c.bf16 %v282, %v279
  %v371 = vpack.c.bf16 %v290, %v287
  %v372 = vpack.c.bf16 %v298, %v295
  %v373 = vpack.c.bf16 %v306, %v303
  %v374 = vpack.c.bf16 %v314, %v311
  %v375 = vpack.c.bf16 %v322, %v319
  %v376 = vpack.c.bf16 %v330, %v327
  %v377 = vpack.c.bf16 %v338, %v335
  %v378 = vpack.c.bf16 %v346, %v343
  %v379 = vpack.c.bf16 %v354, %v351
  %v380 = vpack.c.bf16 %v362, %v359
  %v397 = vunpack.c.l.b16 %v365
  %v398 = vunpack.c.h.b16 %v365
  %v399 = vunpack.c.l.b16 %v366
  %v400 = vunpack.c.h.b16 %v366
  %v401 = vunpack.c.l.b16 %v367
  %v402 = vunpack.c.h.b16 %v367
  %v403 = vunpack.c.l.b16 %v368
  %v404 = vunpack.c.h.b16 %v368
  %v405 = vunpack.c.l.b16 %v369
  %v406 = vunpack.c.h.b16 %v369
  %v407 = vunpack.c.l.b16 %v370
  %v408 = vunpack.c.h.b16 %v370
  %v409 = vunpack.c.l.b16 %v371
  %v410 = vunpack.c.h.b16 %v371
  %v411 = vunpack.c.l.b16 %v372
  %v412 = vunpack.c.h.b16 %v372
  %v413 = vunpack.c.l.b16 %v373
  %v414 = vunpack.c.h.b16 %v373
  %v415 = vunpack.c.l.b16 %v374
  %v416 = vunpack.c.h.b16 %v374
  %v417 = vunpack.c.l.b16 %v375
  %v418 = vunpack.c.h.b16 %v375
  %v419 = vunpack.c.l.b16 %v376
  %v420 = vunpack.c.h.b16 %v376
  %v421 = vunpack.c.l.b16 %v377
  %v422 = vunpack.c.h.b16 %v377
  %v423 = vunpack.c.l.b16 %v378
  %v424 = vunpack.c.h.b16 %v378
  %v425 = vunpack.c.l.b16 %v379
  %v426 = vunpack.c.h.b16 %v379
  %v427 = vunpack.c.l.b16 %v380
  %v428 = vunpack.c.h.b16 %v380
  %v429 = vpack.c.b16 %v397, %v397
  %v430 = vpack.c.b16 %v398, %v398
  %v431 = vpack.c.b16 %v399, %v399
  %v432 = vpack.c.b16 %v400, %v400
  %v433 = vpack.c.b16 %v401, %v401
  %v434 = vpack.c.b16 %v402, %v402
  %v435 = vpack.c.b16 %v403, %v403
  %v436 = vpack.c.b16 %v404, %v404
  %v437 = vpack.c.b16 %v405, %v405
  %v438 = vpack.c.b16 %v406, %v406
  %v439 = vpack.c.b16 %v407, %v407
  %v440 = vpack.c.b16 %v408, %v408
  %v441 = vpack.c.b16 %v409, %v409
  %v442 = vpack.c.b16 %v410, %v410
  %v443 = vpack.c.b16 %v411, %v411
  %v444 = vpack.c.b16 %v412, %v412
  %v445 = vpack.c.b16 %v413, %v413
  %v446 = vpack.c.b16 %v414, %v414
  %v447 = vpack.c.b16 %v415, %v415
  %v448 = vpack.c.b16 %v416, %v416
  %v449 = vpack.c.b16 %v417, %v417
  %v450 = vpack.c.b16 %v418, %v418
  %v451 = vpack.c.b16 %v419, %v419
  %v452 = vpack.c.b16 %v420, %v420
  %v453 = vpack.c.b16 %v421, %v421
  %v454 = vpack.c.b16 %v422, %v422
  %v455 = vpack.c.b16 %v423, %v423
  %v456 = vpack.c.b16 %v424, %v424
  %v457 = vpack.c.b16 %v425, %v425
  %v458 = vpack.c.b16 %v426, %v426
  %v459 = vpack.c.b16 %v427, %v427
  %v460 = vpack.c.b16 %v428, %v428
  %493 = vst [vmem:[%s2] sm:$0xf] %v429
  %494 = vst [vmem:[%s2 + $0x4] sm:$0xf] %v430
  %495 = vst [vmem:[%s2 + $0x8] sm:$0xf] %v431
  %496 = vst [vmem:[%s2 + $0xc] sm:$0xf] %v432
  %497 = vst [vmem:[%s2 + $0x10] sm:$0xf] %v433
  %498 = vst [vmem:[%s2 + $0x14] sm:$0xf] %v434
  %499 = vst [vmem:[%s2 + $0x18] sm:$0xf] %v435
  %500 = vst [vmem:[%s2 + $0x1c] sm:$0xf] %v436
  %501 = vst [vmem:[%s2 + $0x20] sm:$0xf] %v437
  %502 = vst [vmem:[%s2 + $0x24] sm:$0xf] %v438
  %503 = vst [vmem:[%s2 + $0x28] sm:$0xf] %v439
  %504 = vst [vmem:[%s2 + $0x2c] sm:$0xf] %v440
  %505 = vst [vmem:[%s2 + $0x30] sm:$0xf] %v441
  %506 = vst [vmem:[%s2 + $0x34] sm:$0xf] %v442
  %507 = vst [vmem:[%s2 + $0x38] sm:$0xf] %v443
  %508 = vst [vmem:[%s2 + $0x3c] sm:$0xf] %v444
  %509 = vst [vmem:[%s2 + $0x40] sm:$0xf] %v445
  %510 = vst [vmem:[%s2 + $0x44] sm:$0xf] %v446
  %511 = vst [vmem:[%s2 + $0x48] sm:$0xf] %v447
  %512 = vst [vmem:[%s2 + $0x4c] sm:$0xf] %v448
  %513 = vst [vmem:[%s2 + $0x50] sm:$0xf] %v449
  %514 = vst [vmem:[%s2 + $0x54] sm:$0xf] %v450
  %515 = vst [vmem:[%s2 + $0x58] sm:$0xf] %v451
  %516 = vst [vmem:[%s2 + $0x5c] sm:$0xf] %v452
  %517 = vst [vmem:[%s2 + $0x60] sm:$0xf] %v453
  %518 = vst [vmem:[%s2 + $0x64] sm:$0xf] %v454
  %519 = vst [vmem:[%s2 + $0x68] sm:$0xf] %v455
  %520 = vst [vmem:[%s2 + $0x6c] sm:$0xf] %v456
  %521 = vst [vmem:[%s2 + $0x70] sm:$0xf] %v457
  %522 = vst [vmem:[%s2 + $0x74] sm:$0xf] %v458
  %523 = vst [vmem:[%s2 + $0x78] sm:$0xf] %v459
  %524 = vst [vmem:[%s2 + $0x7c] sm:$0xf] %v460
  // Predicated region
  $region10: #{graph_convolution.2} parent=0 // pred_check
    _
  $region11: #{graph_convolution.2} parent=0 // pred_check_branch
    %526 = sbr.rel (0) target = $region13
  $region12: #{graph_convolution.2} parent=0 // pred_region
    _
  $region13: #{graph_convolution.2} parent=0 // pred_fallthru
    _
  // Predicated region
  $region14: #{graph_convolution.2} parent=0 // pred_check
    _
  $region15: #{graph_convolution.2} parent=0 // pred_check_branch
    %528 = sbr.rel (0) target = $region17
  $region16: #{graph_convolution.2} parent=0 // pred_region
    _
  $region17: #{graph_convolution.2} parent=0 // pred_fallthru
    _

// kernel: graph_convolution.3
$region0: #{graph_convolution.3}
  #allocation0 [shape = 'u32[]', space=smem, size = 0x4, offset = 0x4, fixed_abs, tag = 'smem constant byte address 0x4 - core index']
  #allocation1 [shape = 'u32[144,128]{1,0:T(1,128)}', space=vmem, size = 0x12000, scoped, tag = 'internal scratch']
  #allocation2 [shape = 'f32[128,128]{1,0:T(8,128)}', space=vmem, size = 0x10000, scoped, tag = 'scratch operand']
  %s0 = inlined_call_operand.vmem [shape: f32[256,256], index: 0, kind: input, shape index: {}]
  %s1 = inlined_call_operand.vmem [shape: bf16[256,128], index: 1, kind: input, shape index: {}]
  %s2 = inlined_call_operand.vmem [shape: f32[1,128], index: 2, kind: input, shape index: {}]
  %s3 = inlined_call_operand.vmem [shape: f32[256,128], index: 3, kind: output, shape index: {}]
  %s4 = sld [smem:[#allocation0]]
  $region53: #{graph_convolution.3} parent=0
    _
  %s6 = ssub.s32 1, %s4
  %s7 = scalar_select 0, %s6, %s4
  loop: start=0, step=1, limit=4
  $region2: #{graph_convolution.3} parent=0 // loop_pre_header
    _
  $region3: #{graph_convolution.3} parent=0 // loop_header
    %s9 = sphi 0, %s13
    %p10 = scmp.ge.s32.totalorder %s9, 4
    %s16 = sphi 0, %s28
    %s17 = sphi 0, %s24
    %s18 = sphi 0, %s16
    %s19 = sphi 0, %s17
    %s20 = sphi 0, %s18
    %s21 = sphi 0, %s19
    %s33 = sphi 0, %s35
    %s36 = sphi 0, %s33
    %s37 = sphi 0, %s36
    %s53 = sphi 0, %s37
    %s57 = sphi 0, %s57
    %s59 = sphi 0, %s57
    %s60 = sphi 0, %s59
    %s74 = sphi 0, %s60
    %s78 = sphi 0, %s78
    %s80 = sphi 0, %s78
    %s81 = sphi 0, %s80
    %s95 = sphi 0, %s81
    %s101 = sphi 0, %s103
    %s104 = sphi 0, %s101
    %s105 = sphi 0, %s104
    %s121 = sphi 0, %s105
  $region4: #{graph_convolution.3} parent=0 // loop_header_branch
    %12 = sbr.rel (%p10) target = $region8
  $region5: #{graph_convolution.3} parent=0 // loop_body
    %s14 = ssub.s32 %s9, 1
    %s15 = ssub.s32 %s9, 2
    %s22 = sadd.s32 1, %s17
    %p23 = scmp.ge.s32.totalorder %s22, 1
    %s24 = scalar_select %p23, 0, %s22
    %s25 = sadd.s32 1, %s16
    %s26 = scalar_select %p23, %s25, %s16
    %p27 = scmp.ge.s32.totalorder %s26, 2
    %s28 = scalar_select %p27, 0, %s26
    %s29 = ssub.s32 %s16, %s28
    %s30 = ssub.s32 %s17, %s24
    %s31 = sor.u32 %s29, %s30
    %p32 = scmp.eq.s32.totalorder %s31, 0
    %s34 = sadd.s32 %s33, 1
    %s35 = scalar_select %p32, %s33, %s34
    %p38 = pneg %p32
    %p39 = scmp.eq.s32.totalorder %s9, 1
    %p40 = por %p38, %p39
    %p41 = scmp.ne.s32.totalorder %s33, %s36
    %p42 = scmp.eq.s32.totalorder %s9, 0
    %p43 = por %p41, %p42
    %p44 = scmp.ne.s32.totalorder %s33, %s36
    %p45 = scmp.eq.s32.totalorder %s14, 1
    %p46 = por %p44, %p45
    %p47 = scmp.ne.s32.totalorder %s36, %s37
    %p48 = scmp.eq.s32.totalorder %s14, 0
    %p49 = por %p47, %p48
    %p50 = scmp.ne.s32.totalorder %s36, %s37
    %p51 = scmp.eq.s32.totalorder %s15, 1
    %p52 = por %p50, %p51
    %p54 = scmp.ne.s32.totalorder %s37, %s53
    %p55 = scmp.eq.s32.totalorder %s15, 0
    %p56 = por %p54, %p55
    %s58 = sadd.s32 %s57, 1
    %p61 = scmp.eq.s32.totalorder %s9, 1
    %p62 = scmp.ne.s32.totalorder %s57, %s59
    %p63 = scmp.eq.s32.totalorder %s9, 0
    %p64 = por %p62, %p63
    %p65 = scmp.ne.s32.totalorder %s57, %s59
    %p66 = scmp.eq.s32.totalorder %s14, 1
    %p67 = por %p65, %p66
    %p68 = scmp.ne.s32.totalorder %s59, %s60
    %p69 = scmp.eq.s32.totalorder %s14, 0
    %p70 = por %p68, %p69
    %p71 = scmp.ne.s32.totalorder %s59, %s60
    %p72 = scmp.eq.s32.totalorder %s15, 1
    %p73 = por %p71, %p72
    %p75 = scmp.ne.s32.totalorder %s60, %s74
    %p76 = scmp.eq.s32.totalorder %s15, 0
    %p77 = por %p75, %p76
    %s79 = sadd.s32 %s78, 1
    %p82 = scmp.eq.s32.totalorder %s9, 1
    %p83 = scmp.ne.s32.totalorder %s78, %s80
    %p84 = scmp.eq.s32.totalorder %s9, 0
    %p85 = por %p83, %p84
    %p86 = scmp.ne.s32.totalorder %s78, %s80
    %p87 = scmp.eq.s32.totalorder %s14, 1
    %p88 = por %p86, %p87
    %p89 = scmp.ne.s32.totalorder %s80, %s81
    %p90 = scmp.eq.s32.totalorder %s14, 0
    %p91 = por %p89, %p90
    %p92 = scmp.ne.s32.totalorder %s80, %s81
    %p93 = scmp.eq.s32.totalorder %s15, 1
    %p94 = por %p92, %p93
    %p96 = scmp.ne.s32.totalorder %s81, %s95
    %p97 = scmp.eq.s32.totalorder %s15, 0
    %p98 = por %p96, %p97
    %s99 = ssub.s32 %s16, %s28
    %p100 = scmp.eq.s32.totalorder %s99, 0
    %s102 = sadd.s32 %s101, 1
    %s103 = scalar_select %p100, %s101, %s102
    %p106 = pneg %p100
    %p107 = scmp.eq.s32.totalorder %s9, 1
    %p108 = por %p106, %p107
    %p109 = scmp.ne.s32.totalorder %s101, %s104
    %p110 = scmp.eq.s32.totalorder %s9, 0
    %p111 = por %p109, %p110
    %p112 = scmp.ne.s32.totalorder %s101, %s104
    %p113 = scmp.eq.s32.totalorder %s14, 1
    %p114 = por %p112, %p113
    %p115 = scmp.ne.s32.totalorder %s104, %s105
    %p116 = scmp.eq.s32.totalorder %s14, 0
    %p117 = por %p115, %p116
    %p118 = scmp.ne.s32.totalorder %s104, %s105
    %p119 = scmp.eq.s32.totalorder %s15, 1
    %p120 = por %p118, %p119
    %p122 = scmp.ne.s32.totalorder %s105, %s121
    %p123 = scmp.eq.s32.totalorder %s15, 0
    %p124 = por %p122, %p123
    %p125 = scmp.le.s32.totalorder 1, %s9
    %p126 = scmp.lt.s32.totalorder %s9, 3
    %p127 = pnand %p125, %p126
    %p128 = pneg %p127
    // Predicated region
    $region9: #{graph_convolution.3} parent=5 // pred_check
      _
    $region10: #{graph_convolution.3} parent=5 // pred_check_branch
      %130 = sbr.rel (%p127) target = $region12
    $region11: #{graph_convolution.3} parent=5 // pred_region
      %s131 = ssub.s32 %s9, 1
      // Predicated region
      $region13: #{graph_convolution.3} parent=11 // pred_check
        %p132 = pneg %p70
      $region14: #{graph_convolution.3} parent=11 // pred_check_branch
        %134 = sbr.rel (%p132) target = $region16
      $region15: #{graph_convolution.3} parent=11 // pred_region
        _
      $region16: #{graph_convolution.3} parent=11 // pred_fallthru
        _
      // Predicated region
      $region17: #{graph_convolution.3} parent=11 // pred_check
        %p135 = pneg %p91
      $region18: #{graph_convolution.3} parent=11 // pred_check_branch
        %137 = sbr.rel (%p135) target = $region20
      $region19: #{graph_convolution.3} parent=11 // pred_region
        _
      $region20: #{graph_convolution.3} parent=11 // pred_fallthru
        _
    $region12: #{graph_convolution.3} parent=5 // pred_fallthru
      _
    %p138 = scmp.lt.s32.totalorder %s9, 2
    // Predicated region
    $region21: #{graph_convolution.3} parent=5 // pred_check
      %p139 = pneg %p138
    $region22: #{graph_convolution.3} parent=5 // pred_check_branch
      %141 = sbr.rel (%p139) target = $region24
    $region23: #{graph_convolution.3} parent=5 // pred_region
      // Predicated region
      $region25: #{graph_convolution.3} parent=23 // pred_check
        %p142 = pneg %p43
      $region26: #{graph_convolution.3} parent=23 // pred_check_branch
        %144 = sbr.rel (%p142) target = $region28
      $region27: #{graph_convolution.3} parent=23 // pred_region
        %s145 = smul.u32 16, %s16
        %s146 = smul.u32 2, %s17
        %p147 = scmp.lt.s32.totalorder %s145, 31
        %s148 = scalar_select %p147, %s145, 31
        %p149 = scmp.lt.s32.totalorder %s146, 1
        %s150 = scalar_select %p149, %s146, 1
        %s151 = smul.addr %s148, 2
        %s152 = sadd.s32 %s150, %s151
        %s153 = smul.addr %s152, 8
        %s154 = scalar_lea.vmem %s0, %s153
        %s155 = smul.u32 16, %s16
        %s156 = smul.u32 2, %s17
      $region28: #{graph_convolution.3} parent=23 // pred_fallthru
        _
    $region24: #{graph_convolution.3} parent=5 // pred_fallthru
      _
    %p157 = scmp.le.s32.totalorder 1, %s9
    %p158 = scmp.lt.s32.totalorder %s9, 3
    %p159 = pnand %p157, %p158
    %p160 = pneg %p159
    // Predicated region
    $region29: #{graph_convolution.3} parent=5 // pred_check
      _
    $region30: #{graph_convolution.3} parent=5 // pred_check_branch
      %162 = sbr.rel (%p159) target = $region32
    $region31: #{graph_convolution.3} parent=5 // pred_region
      %s163 = ssub.s32 %s9, 1
      %s164 = smul.u32 16, %s18
      %s165 = smul.u32 2, %s19
      %p166 = scmp.lt.s32.totalorder %s164, 31
      %s167 = scalar_select %p166, %s164, 31
      %p168 = scmp.lt.s32.totalorder %s165, 1
      %s169 = scalar_select %p168, %s165, 1
      %s170 = smul.addr %s167, 2
      %s171 = sadd.s32 %s169, %s170
      %s172 = smul.addr %s171, 8
      %s173 = scalar_lea.vmem %s0, %s172
      %p174 = pneg %p49
      %p175 = pneg %p46
      %p176 = pneg %p70
      %p177 = pneg %p67
      %p178 = pneg %p91
      %p179 = pneg %p88
      %p180 = pneg %p117
      %p181 = pneg %p114
      %s182 = smul.u32 16, %s18
      %p183 = scmp.lt.s32.totalorder %s182, 31
      %s184 = scalar_select %p183, %s182, 31
      %s185 = smul.addr %s184, 8
      %s186 = scalar_lea.vmem %s3, %s185
      %s187 = smul.u32 16, %s18
      %s188 = smul.u32 2, %s19
      %p189 = scmp.lt.s32.totalorder %s187, 31
      %s190 = scalar_select %p189, %s187, 31
      %p191 = scmp.lt.s32.totalorder %s188, 1
      %s192 = scalar_select %p191, %s188, 1
      %s193 = smul.addr %s190, 2
      %s194 = sadd.s32 %s192, %s193
      %s195 = smul.addr %s194, 8
      %s196 = scalar_lea.vmem %s0, %s195
      %s197 = smul.u32 16, %s18
      %s198 = smul.u32 2, %s19
      %s199 = smul.u32 16, %s18
      %p200 = scmp.lt.s32.totalorder %s199, 31
      %s201 = scalar_select %p200, %s199, 31
      %s202 = smul.addr %s201, 8
      %s203 = scalar_lea.vmem %s3, %s202
      %s204 = smul.u32 16, %s18
      %p206 = scmp.eq.s32.totalorder %s19, 0
      // Predicated region
      $region33: #{graph_convolution.3} parent=31 // pred_check
        %p207 = pneg %p206
      $region34: #{graph_convolution.3} parent=31 // pred_check_branch
        %209 = sbr.rel (%p207) target = $region36
      $region35: #{graph_convolution.3} parent=31 // pred_region
        %210 = vst [vmem:[#allocation2] sm:$0xff] 0.0
        %211 = vst [vmem:[#allocation2 + $0x8] sm:$0xff] 0.0
        %212 = vst [vmem:[#allocation2 + $0x10] sm:$0xff] 0.0
        %213 = vst [vmem:[#allocation2 + $0x18] sm:$0xff] 0.0
        %214 = vst [vmem:[#allocation2 + $0x20] sm:$0xff] 0.0
        %215 = vst [vmem:[#allocation2 + $0x28] sm:$0xff] 0.0
        %216 = vst [vmem:[#allocation2 + $0x30] sm:$0xff] 0.0
        %217 = vst [vmem:[#allocation2 + $0x38] sm:$0xff] 0.0
        %218 = vst [vmem:[#allocation2 + $0x40] sm:$0xff] 0.0
        %219 = vst [vmem:[#allocation2 + $0x48] sm:$0xff] 0.0
        %220 = vst [vmem:[#allocation2 + $0x50] sm:$0xff] 0.0
        %221 = vst [vmem:[#allocation2 + $0x58] sm:$0xff] 0.0
        %222 = vst [vmem:[#allocation2 + $0x60] sm:$0xff] 0.0
        %223 = vst [vmem:[#allocation2 + $0x68] sm:$0xff] 0.0
        %224 = vst [vmem:[#allocation2 + $0x70] sm:$0xff] 0.0
        %225 = vst [vmem:[#allocation2 + $0x78] sm:$0xff] 0.0
      $region36: #{graph_convolution.3} parent=31 // pred_fallthru
        _
      %v226 = vld [vmem:[%s196] sm:$0xff]
      %v227 = vld [vmem:[%s196 + $0x8] sm:$0xff]
      %v228 = vld [vmem:[%s196 + $0x10] sm:$0xff]
      %v229 = vld [vmem:[%s196 + $0x18] sm:$0xff]
      %v230 = vld [vmem:[%s196 + $0x20] sm:$0xff]
      %v231 = vld [vmem:[%s196 + $0x28] sm:$0xff]
      %v232 = vld [vmem:[%s196 + $0x30] sm:$0xff]
      %v233 = vld [vmem:[%s196 + $0x38] sm:$0xff]
      %v234 = vld [vmem:[%s196 + $0x40] sm:$0xff]
      %v235 = vld [vmem:[%s196 + $0x48] sm:$0xff]
      %v236 = vld [vmem:[%s196 + $0x50] sm:$0xff]
      %v237 = vld [vmem:[%s196 + $0x58] sm:$0xff]
      %v238 = vld [vmem:[%s196 + $0x60] sm:$0xff]
      %v239 = vld [vmem:[%s196 + $0x68] sm:$0xff]
      %v240 = vld [vmem:[%s196 + $0x70] sm:$0xff]
      %v241 = vld [vmem:[%s196 + $0x78] sm:$0xff]
      %v242 = vld [vmem:[%s196 + $0x80] sm:$0xff]
      %v243 = vld [vmem:[%s196 + $0x88] sm:$0xff]
      %v244 = vld [vmem:[%s196 + $0x90] sm:$0xff]
      %v245 = vld [vmem:[%s196 + $0x98] sm:$0xff]
      %v246 = vld [vmem:[%s196 + $0xa0] sm:$0xff]
      %v247 = vld [vmem:[%s196 + $0xa8] sm:$0xff]
      %v248 = vld [vmem:[%s196 + $0xb0] sm:$0xff]
      %v249 = vld [vmem:[%s196 + $0xb8] sm:$0xff]
      %v250 = vld [vmem:[%s196 + $0xc0] sm:$0xff]
      %v251 = vld [vmem:[%s196 + $0xc8] sm:$0xff]
      %v252 = vld [vmem:[%s196 + $0xd0] sm:$0xff]
      %v253 = vld [vmem:[%s196 + $0xd8] sm:$0xff]
      %v254 = vld [vmem:[%s196 + $0xe0] sm:$0xff]
      %v255 = vld [vmem:[%s196 + $0xe8] sm:$0xff]
      %v256 = vld [vmem:[%s196 + $0xf0] sm:$0xff]
      %v257 = vld [vmem:[%s196 + $0xf8] sm:$0xff]
      %v258 = vpack.c.bf16 %v228, %v226
      %v259 = vpack.c.bf16 %v229, %v227
      %v260 = vpack.c.bf16 %v232, %v230
      %v261 = vpack.c.bf16 %v233, %v231
      %v262 = vpack.c.bf16 %v236, %v234
      %v263 = vpack.c.bf16 %v237, %v235
      %v264 = vpack.c.bf16 %v240, %v238
      %v265 = vpack.c.bf16 %v241, %v239
      %v266 = vpack.c.bf16 %v244, %v242
      %v267 = vpack.c.bf16 %v245, %v243
      %v268 = vpack.c.bf16 %v248, %v246
      %v269 = vpack.c.bf16 %v249, %v247
      %v270 = vpack.c.bf16 %v252, %v250
      %v271 = vpack.c.bf16 %v253, %v251
      %v272 = vpack.c.bf16 %v256, %v254
      %v273 = vpack.c.bf16 %v257, %v255
      %s274 = smul.u32 %s19, 256
      %s275 = sshra.s32 %s274, 3
      %s276 = sand.u32 %s274, 7
      %s277 = smul.addr %s275, 4
      %s278 = scalar_lea.vmem %s1, %s277
      %v279 = vld [vmem:[%s278] sm:$0xf]
      %v280 = vld [vmem:[%s278 + $0x4] sm:$0xf]
      %v281 = vld [vmem:[%s278 + $0x8] sm:$0xf]
      %v282 = vld [vmem:[%s278 + $0xc] sm:$0xf]
      %v283 = vld [vmem:[%s278 + $0x10] sm:$0xf]
      %v284 = vld [vmem:[%s278 + $0x14] sm:$0xf]
      %v285 = vld [vmem:[%s278 + $0x18] sm:$0xf]
      %v286 = vld [vmem:[%s278 + $0x1c] sm:$0xf]
      %v287 = vld [vmem:[%s278 + $0x20] sm:$0xf]
      %v288 = vld [vmem:[%s278 + $0x24] sm:$0xf]
      %v289 = vld [vmem:[%s278 + $0x28] sm:$0xf]
      %v290 = vld [vmem:[%s278 + $0x2c] sm:$0xf]
      %v291 = vld [vmem:[%s278 + $0x30] sm:$0xf]
      %v292 = vld [vmem:[%s278 + $0x34] sm:$0xf]
      %v293 = vld [vmem:[%s278 + $0x38] sm:$0xf]
      %v294 = vld [vmem:[%s278 + $0x3c] sm:$0xf]
      %v295 = vld [vmem:[%s278 + $0x40] sm:$0xf]
      %v296 = vld [vmem:[%s278 + $0x44] sm:$0xf]
      %v297 = vld [vmem:[%s278 + $0x48] sm:$0xf]
      %v298 = vld [vmem:[%s278 + $0x4c] sm:$0xf]
      %v299 = vld [vmem:[%s278 + $0x50] sm:$0xf]
      %v300 = vld [vmem:[%s278 + $0x54] sm:$0xf]
      %v301 = vld [vmem:[%s278 + $0x58] sm:$0xf]
      %v302 = vld [vmem:[%s278 + $0x5c] sm:$0xf]
      %v303 = vld [vmem:[%s278 + $0x60] sm:$0xf]
      %v304 = vld [vmem:[%s278 + $0x64] sm:$0xf]
      %v305 = vld [vmem:[%s278 + $0x68] sm:$0xf]
      %v306 = vld [vmem:[%s278 + $0x6c] sm:$0xf]
      %v307 = vld [vmem:[%s278 + $0x70] sm:$0xf]
      %v308 = vld [vmem:[%s278 + $0x74] sm:$0xf]
      %v309 = vld [vmem:[%s278 + $0x78] sm:$0xf]
      %v310 = vld [vmem:[%s278 + $0x7c] sm:$0xf]
      %v311 = vld [vmem:[#allocation2] sm:$0xff]
      %v312 = vld [vmem:[#allocation2 + $0x8] sm:$0xff]
      %v313 = vld [vmem:[#allocation2 + $0x10] sm:$0xff]
      %v314 = vld [vmem:[#allocation2 + $0x18] sm:$0xff]
      %v315 = vld [vmem:[#allocation2 + $0x20] sm:$0xff]
      %v316 = vld [vmem:[#allocation2 + $0x28] sm:$0xff]
      %v317 = vld [vmem:[#allocation2 + $0x30] sm:$0xff]
      %v318 = vld [vmem:[#allocation2 + $0x38] sm:$0xff]
      %v319 = vld [vmem:[#allocation2 + $0x40] sm:$0xff]
      %v320 = vld [vmem:[#allocation2 + $0x48] sm:$0xff]
      %v321 = vld [vmem:[#allocation2 + $0x50] sm:$0xff]
      %v322 = vld [vmem:[#allocation2 + $0x58] sm:$0xff]
      %v323 = vld [vmem:[#allocation2 + $0x60] sm:$0xff]
      %v324 = vld [vmem:[#allocation2 + $0x68] sm:$0xff]
      %v325 = vld [vmem:[#allocation2 + $0x70] sm:$0xff]
      %v326 = vld [vmem:[#allocation2 + $0x78] sm:$0xff]
      %v359 = vunpack.c.l.b16 %v279
      %v360 = vunpack.c.l.b16 %v280
      %v361 = vunpack.c.l.b16 %v281
      %v362 = vunpack.c.l.b16 %v282
      %v363 = vunpack.c.l.b16 %v283
      %v364 = vunpack.c.l.b16 %v284
      %v365 = vunpack.c.l.b16 %v285
      %v366 = vunpack.c.l.b16 %v286
      %v367 = vunpack.c.l.b16 %v287
      %v368 = vunpack.c.l.b16 %v288
      %v369 = vunpack.c.l.b16 %v289
      %v370 = vunpack.c.l.b16 %v290
      %v371 = vunpack.c.l.b16 %v291
      %v372 = vunpack.c.l.b16 %v292
      %v373 = vunpack.c.l.b16 %v293
      %v374 = vunpack.c.l.b16 %v294
      %v375 = vunpack.c.l.b16 %v295
      %v376 = vunpack.c.l.b16 %v296
      %v377 = vunpack.c.l.b16 %v297
      %v378 = vunpack.c.l.b16 %v298
      %v379 = vunpack.c.l.b16 %v299
      %v380 = vunpack.c.l.b16 %v300
      %v381 = vunpack.c.l.b16 %v301
      %v382 = vunpack.c.l.b16 %v302
      %v383 = vunpack.c.l.b16 %v303
      %v384 = vunpack.c.l.b16 %v304
      %v385 = vunpack.c.l.b16 %v305
      %v386 = vunpack.c.l.b16 %v306
      %v387 = vunpack.c.l.b16 %v307
      %v388 = vunpack.c.l.b16 %v308
      %v389 = vunpack.c.l.b16 %v309
      %v390 = vunpack.c.l.b16 %v310
      %v391 = vpack.c.b16 %v360, %v359
      %v392 = vpack.c.b16 %v362, %v361
      %v393 = vpack.c.b16 %v364, %v363
      %v394 = vpack.c.b16 %v366, %v365
      %v395 = vpack.c.b16 %v368, %v367
      %v396 = vpack.c.b16 %v370, %v369
      %v397 = vpack.c.b16 %v372, %v371
      %v398 = vpack.c.b16 %v374, %v373
      %v399 = vpack.c.b16 %v376, %v375
      %v400 = vpack.c.b16 %v378, %v377
      %v401 = vpack.c.b16 %v380, %v379
      %v402 = vpack.c.b16 %v382, %v381
      %v403 = vpack.c.b16 %v384, %v383
      %v404 = vpack.c.b16 %v386, %v385
      %v405 = vpack.c.b16 %v388, %v387
      %v406 = vpack.c.b16 %v390, %v389
      %423 = vmatprep.subr.bf16.mxu0 0
      %424 = vmatpush1.bf16.msra.mxu0 %v391
      %425 = vmatprep.subr.bf16.mxu0 0
      %426 = vmatpush1.bf16.msra.mxu0 %v392
      %427 = vmatprep.subr.bf16.mxu0 0
      %428 = vmatpush1.bf16.msra.mxu0 %v393
      %429 = vmatprep.subr.bf16.mxu0 0
      %430 = vmatpush1.bf16.msra.mxu0 %v394
      %431 = vmatprep.subr.bf16.mxu0 0
      %432 = vmatpush1.bf16.msra.mxu0 %v395
      %433 = vmatprep.subr.bf16.mxu0 0
      %434 = vmatpush1.bf16.msra.mxu0 %v396
      %435 = vmatprep.subr.bf16.mxu0 0
      %436 = vmatpush1.bf16.msra.mxu0 %v397
      %437 = vmatprep.subr.bf16.mxu0 0
      %438 = vmatpush1.bf16.msra.mxu0 %v398
      %439 = vmatprep.subr.bf16.mxu0 0
      %440 = vmatpush1.bf16.msra.mxu0 %v399
      %441 = vmatprep.subr.bf16.mxu0 0
      %442 = vmatpush1.bf16.msra.mxu0 %v400
      %443 = vmatprep.subr.bf16.mxu0 0
      %444 = vmatpush1.bf16.msra.mxu0 %v401
      %445 = vmatprep.subr.bf16.mxu0 0
      %446 = vmatpush1.bf16.msra.mxu0 %v402
      %447 = vmatprep.subr.bf16.mxu0 0
      %448 = vmatpush1.bf16.msra.mxu0 %v403
      %449 = vmatprep.subr.bf16.mxu0 0
      %450 = vmatpush1.bf16.msra.mxu0 %v404
      %451 = vmatprep.subr.bf16.mxu0 0
      %452 = vmatpush1.bf16.msra.mxu0 %v405
      %453 = vmatprep.subr.bf16.mxu0 0
      %454 = vmatpush1.bf16.msra.mxu0 %v406
      %455 = vmatprep.mubr.bf16.mxu0 %v259
      %456 = vmatmul.mubr.bf16.gmra.mrb[0].mxu0 %v258
      %v457 = vpop.f32.mrb[0].mxu0
      %v458 = vadd.f32 0.0, %v457
      %v459 = vpop.f32.mrb[0].mxu0
      %v460 = vpop.f32.mrb[0].mxu0
      %v461 = vadd.f32 0.0, %v460
      %v462 = vpop.f32.mrb[0].mxu0
      %463 = vmatprep.mubr.bf16.mxu0 %v261
      %464 = vmatmul.mubr.bf16.gmra.mrb[0].mxu0 %v260
      %v465 = vpop.f32.mrb[0].mxu0
      %v466 = vadd.f32 0.0, %v465
      %v467 = vpop.f32.mrb[0].mxu0
      %v468 = vpop.f32.mrb[0].mxu0
      %v469 = vadd.f32 0.0, %v468
      %v470 = vpop.f32.mrb[0].mxu0
      %471 = vmatprep.mubr.bf16.mxu0 %v263
      %472 = vmatmul.mubr.bf16.gmra.mrb[0].mxu0 %v262
      %v473 = vpop.f32.mrb[0].mxu0
      %v474 = vadd.f32 0.0, %v473
      %v475 = vpop.f32.mrb[0].mxu0
      %v476 = vpop.f32.mrb[0].mxu0
      %v477 = vadd.f32 0.0, %v476
      %v478 = vpop.f32.mrb[0].mxu0
      %479 = vmatprep.mubr.bf16.mxu0 %v265
      %480 = vmatmul.mubr.bf16.gmra.mrb[0].mxu0 %v264
      %v481 = vpop.f32.mrb[0].mxu0
      %v482 = vadd.f32 0.0, %v481
      %v483 = vpop.f32.mrb[0].mxu0
      %v484 = vpop.f32.mrb[0].mxu0
      %v485 = vadd.f32 0.0, %v484
      %v486 = vpop.f32.mrb[0].mxu0
      %487 = vmatprep.mubr.bf16.mxu0 %v267
      %488 = vmatmul.mubr.bf16.gmra.mrb[0].mxu0 %v266
      %v489 = vpop.f32.mrb[0].mxu0
      %v490 = vadd.f32 0.0, %v489
      %v491 = vpop.f32.mrb[0].mxu0
      %v492 = vpop.f32.mrb[0].mxu0
      %v493 = vadd.f32 0.0, %v492
      %v494 = vpop.f32.mrb[0].mxu0
      %495 = vmatprep.mubr.bf16.mxu0 %v269
      %496 = vmatmul.mubr.bf16.gmra.mrb[0].mxu0 %v268
      %v497 = vpop.f32.mrb[0].mxu0
      %v498 = vadd.f32 0.0, %v497
      %v499 = vpop.f32.mrb[0].mxu0
      %v500 = vpop.f32.mrb[0].mxu0
      %v501 = vadd.f32 0.0, %v500
      %v502 = vpop.f32.mrb[0].mxu0
      %503 = vmatprep.mubr.bf16.mxu0 %v271
      %504 = vmatmul.mubr.bf16.gmra.mrb[0].mxu0 %v270
      %v505 = vpop.f32.mrb[0].mxu0
      %v506 = vadd.f32 0.0, %v505
      %v507 = vpop.f32.mrb[0].mxu0
      %v508 = vpop.f32.mrb[0].mxu0
      %v509 = vadd.f32 0.0, %v508
      %v510 = vpop.f32.mrb[0].mxu0
      %511 = vmatprep.mubr.bf16.mxu0 %v273
      %512 = vmatmul.mubr.bf16.gmra.mrb[0].mxu0 %v272
      %v513 = vpop.f32.mrb[0].mxu0
      %v514 = vadd.f32 0.0, %v513
      %v515 = vpop.f32.mrb[0].mxu0
      %v516 = vpop.f32.mrb[0].mxu0
      %v517 = vadd.f32 0.0, %v516
      %v518 = vpop.f32.mrb[0].mxu0
      %519 = vdwg.mxu0
      %v520 = vadd.f32 %v311, %v458
      %v521 = vadd.f32 %v312, %v461
      %v522 = vadd.f32 %v313, %v466
      %v523 = vadd.f32 %v314, %v469
      %v524 = vadd.f32 %v315, %v474
      %v525 = vadd.f32 %v316, %v477
      %v526 = vadd.f32 %v317, %v482
      %v527 = vadd.f32 %v318, %v485
      %v528 = vadd.f32 %v319, %v490
      %v529 = vadd.f32 %v320, %v493
      %v530 = vadd.f32 %v321, %v498
      %v531 = vadd.f32 %v322, %v501
      %v532 = vadd.f32 %v323, %v506
      %v533 = vadd.f32 %v324, %v509
      %v534 = vadd.f32 %v325, %v514
      %v535 = vadd.f32 %v326, %v517
      %536 = vst [vmem:[#allocation2] sm:$0xff] %v520
      %537 = vst [vmem:[#allocation2 + $0x8] sm:$0xff] %v521
      %538 = vst [vmem:[#allocation2 + $0x10] sm:$0xff] %v522
      %539 = vst [vmem:[#allocation2 + $0x18] sm:$0xff] %v523
      %540 = vst [vmem:[#allocation2 + $0x20] sm:$0xff] %v524
      %541 = vst [vmem:[#allocation2 + $0x28] sm:$0xff] %v525
      %542 = vst [vmem:[#allocation2 + $0x30] sm:$0xff] %v526
      %543 = vst [vmem:[#allocation2 + $0x38] sm:$0xff] %v527
      %544 = vst [vmem:[#allocation2 + $0x40] sm:$0xff] %v528
      %545 = vst [vmem:[#allocation2 + $0x48] sm:$0xff] %v529
      %546 = vst [vmem:[#allocation2 + $0x50] sm:$0xff] %v530
      %547 = vst [vmem:[#allocation2 + $0x58] sm:$0xff] %v531
      %548 = vst [vmem:[#allocation2 + $0x60] sm:$0xff] %v532
      %549 = vst [vmem:[#allocation2 + $0x68] sm:$0xff] %v533
      %550 = vst [vmem:[#allocation2 + $0x70] sm:$0xff] %v534
      %551 = vst [vmem:[#allocation2 + $0x78] sm:$0xff] %v535
      // Predicated region
      $region37: #{graph_convolution.3} parent=31 // pred_check
        %p552 = pneg %p206
      $region38: #{graph_convolution.3} parent=31 // pred_check_branch
        %554 = sbr.rel (%p552) target = $region40
      $region39: #{graph_convolution.3} parent=31 // pred_region
        %v555 = vld [vmem:[#allocation2] sm:$0xff]
        %v556 = vld [vmem:[#allocation2 + $0x8] sm:$0xff]
        %v557 = vld [vmem:[#allocation2 + $0x10] sm:$0xff]
        %v558 = vld [vmem:[#allocation2 + $0x18] sm:$0xff]
        %v559 = vld [vmem:[#allocation2 + $0x20] sm:$0xff]
        %v560 = vld [vmem:[#allocation2 + $0x28] sm:$0xff]
        %v561 = vld [vmem:[#allocation2 + $0x30] sm:$0xff]
        %v562 = vld [vmem:[#allocation2 + $0x38] sm:$0xff]
        %v563 = vld [vmem:[#allocation2 + $0x40] sm:$0xff]
        %v564 = vld [vmem:[#allocation2 + $0x48] sm:$0xff]
        %v565 = vld [vmem:[#allocation2 + $0x50] sm:$0xff]
        %v566 = vld [vmem:[#allocation2 + $0x58] sm:$0xff]
        %v567 = vld [vmem:[#allocation2 + $0x60] sm:$0xff]
        %v568 = vld [vmem:[#allocation2 + $0x68] sm:$0xff]
        %v569 = vld [vmem:[#allocation2 + $0x70] sm:$0xff]
        %v570 = vld [vmem:[#allocation2 + $0x78] sm:$0xff]
        %v571 = vld [vmem:[%s2] sm:$0x1]
        %v573 = vlaneseq
        %v574 = vshrl.u32 %v573, 7
        %v575 = vsub.s32 0, %v574
        %v576 = vrot.slane %v571, %v575
        %v578 = vadd.f32 %v555, %v576
        %v579 = vadd.f32 %v556, %v576
        %v580 = vadd.f32 %v557, %v576
        %v581 = vadd.f32 %v558, %v576
        %v582 = vadd.f32 %v559, %v576
        %v583 = vadd.f32 %v560, %v576
        %v584 = vadd.f32 %v561, %v576
        %v585 = vadd.f32 %v562, %v576
        %v586 = vadd.f32 %v563, %v576
        %v587 = vadd.f32 %v564, %v576
        %v588 = vadd.f32 %v565, %v576
        %v589 = vadd.f32 %v566, %v576
        %v590 = vadd.f32 %v567, %v576
        %v591 = vadd.f32 %v568, %v576
        %v592 = vadd.f32 %v569, %v576
        %v593 = vadd.f32 %v570, %v576
        %594 = vst [vmem:[%s203] sm:$0xff] %v578
        %595 = vst [vmem:[%s203 + $0x8] sm:$0xff] %v579
        %596 = vst [vmem:[%s203 + $0x10] sm:$0xff] %v580
        %597 = vst [vmem:[%s203 + $0x18] sm:$0xff] %v581
        %598 = vst [vmem:[%s203 + $0x20] sm:$0xff] %v582
        %599 = vst [vmem:[%s203 + $0x28] sm:$0xff] %v583
        %600 = vst [vmem:[%s203 + $0x30] sm:$0xff] %v584
        %601 = vst [vmem:[%s203 + $0x38] sm:$0xff] %v585
        %602 = vst [vmem:[%s203 + $0x40] sm:$0xff] %v586
        %603 = vst [vmem:[%s203 + $0x48] sm:$0xff] %v587
        %604 = vst [vmem:[%s203 + $0x50] sm:$0xff] %v588
        %605 = vst [vmem:[%s203 + $0x58] sm:$0xff] %v589
        %606 = vst [vmem:[%s203 + $0x60] sm:$0xff] %v590
        %607 = vst [vmem:[%s203 + $0x68] sm:$0xff] %v591
        %608 = vst [vmem:[%s203 + $0x70] sm:$0xff] %v592
        %609 = vst [vmem:[%s203 + $0x78] sm:$0xff] %v593
      $region40: #{graph_convolution.3} parent=31 // pred_fallthru
        _
      %s610 = smul.u32 16, %s18
      %p611 = scmp.lt.s32.totalorder %s610, 31
      %s612 = scalar_select %p611, %s610, 31
      %s613 = smul.addr %s612, 8
      %s614 = scalar_lea.vmem %s3, %s613
      // Predicated region
      $region41: #{graph_convolution.3} parent=31 // pred_check
        %p615 = pneg %p114
      $region42: #{graph_convolution.3} parent=31 // pred_check_branch
        %617 = sbr.rel (%p615) target = $region44
      $region43: #{graph_convolution.3} parent=31 // pred_region
        %s618 = smul.u32 16, %s18
      $region44: #{graph_convolution.3} parent=31 // pred_fallthru
        _
    $region32: #{graph_convolution.3} parent=5 // pred_fallthru
      _
    %p619 = scmp.le.s32.totalorder 2, %s9
    // Predicated region
    $region45: #{graph_convolution.3} parent=5 // pred_check
      %p620 = pneg %p619
    $region46: #{graph_convolution.3} parent=5 // pred_check_branch
      %622 = sbr.rel (%p620) target = $region48
    $region47: #{graph_convolution.3} parent=5 // pred_region
      %s623 = ssub.s32 %s9, 2
      // Predicated region
      $region49: #{graph_convolution.3} parent=47 // pred_check
        %p624 = pneg %p120
      $region50: #{graph_convolution.3} parent=47 // pred_check_branch
        %626 = sbr.rel (%p624) target = $region52
      $region51: #{graph_convolution.3} parent=47 // pred_region
        %s627 = smul.u32 16, %s20
        %p628 = scmp.lt.s32.totalorder %s627, 31
        %s629 = scalar_select %p628, %s627, 31
        %s630 = smul.addr %s629, 8
        %s631 = scalar_lea.vmem %s3, %s630
      $region52: #{graph_convolution.3} parent=47 // pred_fallthru
        _
    $region48: #{graph_convolution.3} parent=5 // pred_fallthru
      _
  $region6: #{graph_convolution.3} parent=0 // loop_footer
    %s13 = sadd.s32 1, %s9
  $region7: #{graph_convolution.3} parent=0 // loop_footer_branch
    %8 = sbr.rel target = $region3
  $region8: #{graph_convolution.3} parent=0 // loop_exit
    _

</llo_original>
